<compile_context>
chip_gen: v5e
topology: v5e:2x2
jax: 0.10.0
libtpu: 0.0.40
codegen_flags: <defaults>
</compile_context>

<pallas_src>
import functools

import jax
import jax.numpy as jnp
from jax import lax
from jax.experimental import pallas as pl
from jax.experimental.pallas import tpu as pltpu

EPS = 1e-6
ROW_TILE = 256      # rows per grid step (mem-bound kernels need big tiles to hit HBM roofline)
COL_TILE_K = 512    # K tile for the fused matmul (multiple of 128)
COL_TILE_N = 256    # N tile for the fused matmul (multiple of 128, lane-dense output)


# ---------------------------------------------------------------------------
# small helpers
# ---------------------------------------------------------------------------
def _round_up(n, m):
    return (n + m - 1) // m * m


def _pick_row_tile(rows, target=ROW_TILE):
    """Row tile: big (256) when possible, otherwise the whole (8-padded) row count."""
    if rows >= target:
        return target
    return max(8, _round_up(rows, 8))


def _pick_col_tile(dim, target):
    """Column tile: multiple of 128 that divides dim, or the full dim when it is small."""
    if dim <= target:
        return dim
    t = (target // 128) * 128
    while t >= 128:
        if dim % t == 0:
            return t
        t -= 128
    return dim


def _pad_rows(x2d, tm):
    rows = x2d.shape[0]
    mp = _round_up(rows, tm)
    if mp != rows:
        x2d = jnp.pad(x2d, ((0, mp - rows), (0, 0)))
    return x2d


def _keep_threshold(p):
    # keep element iff bits >= threshold  ->  P(keep) = 1 - p
    t = int(round(float(p) * 4294967296.0))
    t = max(0, min(t, 4294967295))
    return jnp.uint32(t)


def _tile_random_bits(shape, seed, row_off, col_off, n_cols):
    """Counter-based hash PRNG (splitmix32-style) over global element indices.

    Pure uint32 elementwise ops -> works both compiled on TPU and in interpret mode
    (pltpu.prng_* has no CPU lowering).
    """
    seed_u = jnp.asarray(seed, jnp.int32).astype(jnp.uint32)
    r = (lax.broadcasted_iota(jnp.int32, shape, 0)
         + jnp.asarray(row_off, jnp.int32)).astype(jnp.uint32)
    c = (lax.broadcasted_iota(jnp.int32, shape, 1)
         + jnp.asarray(col_off, jnp.int32)).astype(jnp.uint32)
    x = r * jnp.uint32(n_cols) + c
    x = x ^ (seed_u * jnp.uint32(0x9E3779B9))
    x = x ^ (x >> 16)
    x = x * jnp.uint32(0x7FEB352D)
    x = x ^ (x >> 15)
    x = x * jnp.uint32(0x846CA68B)
    x = x ^ (x >> 16)
    return x


# ---------------------------------------------------------------------------
# Kernel 1: LayerNorm over the last dim (torch semantics: unbiased std, eps on std)
# ---------------------------------------------------------------------------
def _layernorm_kernel(x_ref, g_ref, b_ref, o_ref):
    x = x_ref[...].astype(jnp.float32)                          # (tm, H)
    h = x.shape[-1]
    mean = jnp.mean(x, axis=-1, keepdims=True)
    xc = x - mean
    var = jnp.sum(xc * xc, axis=-1, keepdims=True) / (h - 1)    # unbiased, like torch .std()
    rstd = 1.0 / (jnp.sqrt(var) + EPS)
    o_ref[...] = (g_ref[...] * xc * rstd + b_ref[...]).astype(o_ref.dtype)


def layer_norm(x2d, a_2, b_2):
    rows, h = x2d.shape
    tm = _pick_row_tile(rows)
    xp = _pad_rows(x2d, tm)
    mp = xp.shape[0]
    out = pl.pallas_call(
        _layernorm_kernel,
        out_shape=jax.ShapeDtypeStruct((mp, h), x2d.dtype),
        grid=(mp // tm,),
        in_specs=[
            pl.BlockSpec((tm, h), lambda i: (i, 0)),
            pl.BlockSpec((1, h), lambda i: (0, 0)),
            pl.BlockSpec((1, h), lambda i: (0, 0)),
        ],
        out_specs=pl.BlockSpec((tm, h), lambda i: (i, 0)),
        compiler_params=pltpu.CompilerParams(dimension_semantics=("parallel",)),
    )(xp, a_2.reshape(1, h), b_2.reshape(1, h))
    return out[:rows]


# ---------------------------------------------------------------------------
# Kernel 2: residual add + inverted dropout (hash-based PRNG, integer keep test)
# ---------------------------------------------------------------------------
def _residual_dropout_kernel(seed_ref, x_ref, y_ref, o_ref, *, p, train, tm, h):
    i = pl.program_id(0)                      # hoisted: never call program_id inside pl.when
    x = x_ref[...].astype(jnp.float32)
    y = y_ref[...].astype(jnp.float32)
    if train and p > 0.0:
        bits = _tile_random_bits((tm, h), seed_ref[0], i * tm, 0, h)
        keep = bits >= _keep_threshold(p)
        y = jnp.where(keep, y * (1.0 / (1.0 - p)), 0.0)
    o_ref[...] = (x + y).astype(o_ref.dtype)


def residual_dropout(x2d, y2d, seed, p, train):
    rows, h = x2d.shape
    tm = _pick_row_tile(rows)
    xp = _pad_rows(x2d, tm)
    yp = _pad_rows(y2d, tm)
    mp = xp.shape[0]
    kernel = functools.partial(
        _residual_dropout_kernel, p=float(p), train=bool(train), tm=tm, h=h)
    out = pl.pallas_call(
        kernel,
        out_shape=jax.ShapeDtypeStruct((mp, h), x2d.dtype),
        grid_spec=pltpu.PrefetchScalarGridSpec(
            num_scalar_prefetch=1,
            grid=(mp // tm,),
            in_specs=[
                pl.BlockSpec((tm, h), lambda i, *_: (i, 0)),
                pl.BlockSpec((tm, h), lambda i, *_: (i, 0)),
            ],
            out_specs=pl.BlockSpec((tm, h), lambda i, *_: (i, 0)),
        ),
        compiler_params=pltpu.CompilerParams(dimension_semantics=("parallel",)),
    )(jnp.asarray([seed], jnp.int32), xp, yp)
    return out[:rows]


# ---------------------------------------------------------------------------
# Generic SublayerConnection wrapper (arbitrary sublayer callable)
# ---------------------------------------------------------------------------
def sublayer_connection(x, sublayer, a_2, b_2, *, dropout_p, train, seed=0):
    b, s, h = x.shape
    x2d = x.reshape(b * s, h)
    normed = layer_norm(x2d, a_2, b_2).reshape(b, s, h)          # Pallas kernel 1
    y2d = jnp.asarray(sublayer(normed)).reshape(b * s, h)        # arbitrary sublayer
    out2d = residual_dropout(x2d, y2d, seed, dropout_p, train)   # Pallas kernel 2
    return out2d.reshape(b, s, h)


# ---------------------------------------------------------------------------
# Fused fast path for a Linear(size, size) sublayer:
#   out = x + dropout( LayerNorm(x) @ W + bias )
# ---------------------------------------------------------------------------
def _row_stats_kernel(x_ref, mean_ref, rstd_ref):
    x = x_ref[...].astype(jnp.float32)
    h = x.shape[-1]
    mean = jnp.mean(x, axis=-1, keepdims=True)
    xc = x - mean
    var = jnp.sum(xc * xc, axis=-1, keepdims=True) / (h - 1)
    mean_ref[...] = mean
    rstd_ref[...] = 1.0 / (jnp.sqrt(var) + EPS)


def _row_stats(xp, tm):
    mp, h = xp.shape
    return pl.pallas_call(
        _row_stats_kernel,
        out_shape=(jax.ShapeDtypeStruct((mp, 1), jnp.float32),
                   jax.ShapeDtypeStruct((mp, 1), jnp.float32)),
        grid=(mp // tm,),
        in_specs=[pl.BlockSpec((tm, h), lambda i: (i, 0))],
        out_specs=(pl.BlockSpec((tm, 1), lambda i: (i, 0)),
                   pl.BlockSpec((tm, 1), lambda i: (i, 0))),
        compiler_params=pltpu.CompilerParams(dimension_semantics=("parallel",)),
    )(xp)


def _fused_ln_linear_kernel(seed_ref, x_ref, w_ref, bias_ref, g_ref, b_ref,
                            mean_ref, rstd_ref, xres_ref, o_ref, acc_ref,
                            *, p, train, tm, tn, n_total):
    # Hoist ALL grid-index reads to the top level of the kernel body; program_id inside
    # a pl.when closure produces an un-lowerable primitive on the CPU/interpret path.
    i = pl.program_id(0)
    j = pl.program_id(1)
    k = pl.program_id(2)
    k_last = pl.num_programs(2) - 1

    @pl.when(k == 0)
    def _():
        acc_ref[...] = jnp.zeros_like(acc_ref)

    # Prologue: LayerNorm applied block-wise to the LHS tile (stats are per-row scalars).
    x = x_ref[...].astype(jnp.float32)                                  # (tm, tk)
    normed = g_ref[...] * (x - mean_ref[...]) * rstd_ref[...] + b_ref[...]
    # TODO(synk): on v6e/v7x cast `normed`/W to bf16 here for full MXU rate (keep f32 on v5e).
    acc_ref[...] += jnp.dot(normed.astype(w_ref.dtype), w_ref[...],
                            preferred_element_type=jnp.float32)

    # Epilogue: bias + inverted dropout + residual add, written once per (i, j) tile.
    @pl.when(k == k_last)
    def _():
        y = acc_ref[...] + bias_ref[...].astype(jnp.float32)
        if train and p > 0.0:
            bits = _tile_random_bits((tm, tn), seed_ref[0], i * tm, j * tn, n_total)
            keep = bits >= _keep_threshold(p)
            y = jnp.where(keep, y * (1.0 / (1.0 - p)), 0.0)
        o_ref[...] = (xres_ref[...].astype(jnp.float32) + y).astype(o_ref.dtype)


def sublayer_connection_fused(x, w, bias, a_2, b_2, *, dropout_p, train, seed=0):
    """Fully fused: x + dropout(LayerNorm(x) @ w + bias), one matmul kernel + tiny stats pass."""
    b, s, h = x.shape
    k_dim, n = w.shape
    assert k_dim == h and n == h, "residual connection requires a Linear(size, size) sublayer"

    rows = b * s
    x2d = x.reshape(rows, h)
    tm = _pick_row_tile(rows)
    xp = _pad_rows(x2d, tm)
    mp = xp.shape[0]
    tk = _pick_col_tile(h, COL_TILE_K)
    tn = _pick_col_tile(n, COL_TILE_N)

    mean, rstd = _row_stats(xp, tm)   # small per-row stats pass (M x 2 floats)

    kernel = functools.partial(
        _fused_ln_linear_kernel,
        p=float(dropout_p), train=bool(train), tm=tm, tn=tn, n_total=n)

    out = pl.pallas_call(
        kernel,
        out_shape=jax.ShapeDtypeStruct((mp, n), x.dtype),
        grid_spec=pltpu.PrefetchScalarGridSpec(
            num_scalar_prefetch=1,
            grid=(mp // tm, n // tn, h // tk),
            in_specs=[
                pl.BlockSpec((tm, tk), lambda i, j, k, *_: (i, k)),   # x (LHS / LayerNorm input)
                pl.BlockSpec((tk, tn), lambda i, j, k, *_: (k, j)),   # W
                pl.BlockSpec((1, tn), lambda i, j, k, *_: (0, j)),    # linear bias
                pl.BlockSpec((1, tk), lambda i, j, k, *_: (0, k)),    # a_2 (gamma)
                pl.BlockSpec((1, tk), lambda i, j, k, *_: (0, k)),    # b_2 (beta)
                pl.BlockSpec((tm, 1), lambda i, j, k, *_: (i, 0)),    # per-row mean
                pl.BlockSpec((tm, 1), lambda i, j, k, *_: (i, 0)),    # per-row 1/(std+eps)
                pl.BlockSpec((tm, tn), lambda i, j, k, *_: (i, j)),   # x (residual tile)
            ],
            out_specs=pl.BlockSpec((tm, tn), lambda i, j, k, *_: (i, j)),
            scratch_shapes=[pltpu.VMEM((tm, tn), jnp.float32)],
        ),
        compiler_params=pltpu.CompilerParams(
            dimension_semantics=("parallel", "parallel", "arbitrary")),
    )(jnp.asarray([seed], jnp.int32), xp, w, bias.reshape(1, n),
      a_2.reshape(1, h), b_2.reshape(1, h), mean, rstd, xp)

    return out[:rows].reshape(b, s, h)


# ---------------------------------------------------------------------------
# main
# ---------------------------------------------------------------------------
if __name__ == "__main__":
    B, S, H = 2, 8, 128   # hidden chosen lane-dense (multiple of 128)
    key = jax.random.PRNGKey(0)
    kx, kw, kb = jax.random.split(key, 3)

    x = jax.random.normal(kx, (B, S, H), dtype=jnp.float32)

    # LayerNorm params, deterministic init exactly as in the module __init__.
    a_2 = jnp.ones((H,), jnp.float32)
    b_2 = jnp.zeros((H,), jnp.float32)

    # Example sublayer params: Linear(H, H).
    w = jax.random.normal(kw, (H, H), dtype=jnp.float32) * (1.0 / jnp.sqrt(H))
    wb = jax.random.normal(kb, (H,), dtype=jnp.float32) * 0.1

    # Pure-JAX reference (eval mode: dropout is identity).
    x2d = x.reshape(B * S, H)
    mean = x2d.mean(-1, keepdims=True)
    std = jnp.std(x2d, axis=-1, keepdims=True, ddof=1)
    normed_ref = a_2 * (x2d - mean) / (std + EPS) + b_2
    ref = (x2d + normed_ref @ w + wb).reshape(B, S, H)

    # 1) Generic path (arbitrary sublayer callable), eval mode.
    sub = lambda z: z @ w + wb
    out_gen = sublayer_connection(x, sub, a_2, b_2, dropout_p=0.0, train=False)
    assert jnp.allclose(out_gen, ref, atol=2e-2, rtol=2e-2), "generic path mismatch vs reference"

    # 2) Fused path (LayerNorm prologue + matmul + dropout/residual epilogue), eval mode.
    out_fused = sublayer_connection_fused(x, w, wb, a_2, b_2, dropout_p=0.0, train=False)
    assert jnp.allclose(out_fused, ref, atol=2e-2, rtol=2e-2), "fused path mismatch vs reference"

    # Training-mode runs (dropout active) on both paths.
    # TODO(synk): the dropout mask comes from an in-kernel counter-based hash PRNG, so
    # only the Bernoulli(1-p) + 1/(1-p) scaling semantics match torch, not its RNG bits.
    out_train_gen = sublayer_connection(x, sub, a_2, b_2,
                                        dropout_p=0.1, train=True, seed=123)
    out_train = sublayer_connection_fused(x, w, wb, a_2, b_2,
                                          dropout_p=0.1, train=True, seed=123)
    jax.block_until_ready(out_train_gen)
    jax.block_until_ready(out_train)
    assert bool(jnp.all(jnp.isfinite(out_train))), "fused training output not finite"
    print("KERNEL_OK")
</pallas_src>

<mosaic_0001>
module attributes {stable_mosaic.version = 11 : i64} {
  func.func @_layernorm_kernel(%arg0: i32, %arg1: memref<16x128xf32, #tpu.memory_space<vmem>>, %arg2: memref<1x128xf32, #tpu.memory_space<vmem>>, %arg3: memref<1x128xf32, #tpu.memory_space<vmem>>, %arg4: memref<16x128xf32, #tpu.memory_space<vmem>>) attributes {dimension_semantics = [#tpu.dimension_semantics<parallel>], iteration_bounds = array<i64: 1>, scalar_prefetch = 0 : i64, scratch_operands = 0 : i64, tpu.core_type = #tpu.core_type<tc>, window_params = [{transform_indices = @transform_0, window_bounds = array<i64: 16, 128>}, {pipeline_mode = #tpu.pipeline_mode<synchronous>, transform_indices = @transform_1, window_bounds = array<i64: 1, 128>}, {pipeline_mode = #tpu.pipeline_mode<synchronous>, transform_indices = @transform_2, window_bounds = array<i64: 1, 128>}, {transform_indices = @transform_3, window_bounds = array<i64: 16, 128>}]} {
    %c0 = arith.constant 0 : index
    %c0_0 = arith.constant 0 : index
    %0 = vector.load %arg1[%c0, %c0_0] : memref<16x128xf32, #tpu.memory_space<vmem>>, vector<16x128xf32>
    %cst = arith.constant dense<0.000000e+00> : vector<16xf32>
    %1 = vector.multi_reduction <add>, %0, %cst [1] : vector<16x128xf32> to vector<16xf32>
    %2 = vector.shape_cast %1 : vector<16xf32> to vector<16x1xf32>
    %cst_1 = arith.constant 1.280000e+02 : f32
    %3 = vector.broadcast %cst_1 : f32 to vector<16x1xf32>
    %4 = arith.divf %2, %3 : vector<16x1xf32>
    %5 = vector.broadcast %4 : vector<16x1xf32> to vector<16x128xf32>
    %6 = arith.subf %0, %5 : vector<16x128xf32>
    %7 = arith.mulf %6, %6 : vector<16x128xf32>
    %cst_2 = arith.constant dense<0.000000e+00> : vector<16xf32>
    %8 = vector.multi_reduction <add>, %7, %cst_2 [1] : vector<16x128xf32> to vector<16xf32>
    %9 = vector.shape_cast %8 : vector<16xf32> to vector<16x1xf32>
    %cst_3 = arith.constant 1.270000e+02 : f32
    %10 = vector.broadcast %cst_3 : f32 to vector<16x1xf32>
    %11 = arith.divf %9, %10 : vector<16x1xf32>
    %12 = math.sqrt %11 : vector<16x1xf32>
    %cst_4 = arith.constant 9.99999997E-7 : f32
    %13 = vector.broadcast %cst_4 : f32 to vector<16x1xf32>
    %14 = arith.addf %12, %13 : vector<16x1xf32>
    %cst_5 = arith.constant 1.000000e+00 : f32
    %15 = vector.broadcast %cst_5 : f32 to vector<16x1xf32>
    %16 = arith.divf %15, %14 : vector<16x1xf32>
    %c0_6 = arith.constant 0 : index
    %c0_7 = arith.constant 0 : index
    %17 = vector.load %arg2[%c0_6, %c0_7] : memref<1x128xf32, #tpu.memory_space<vmem>>, vector<1x128xf32>
    %18 = vector.broadcast %17 : vector<1x128xf32> to vector<16x128xf32>
    %19 = arith.mulf %18, %6 : vector<16x128xf32>
    %20 = vector.broadcast %16 : vector<16x1xf32> to vector<16x128xf32>
    %21 = arith.mulf %19, %20 : vector<16x128xf32>
    %c0_8 = arith.constant 0 : index
    %c0_9 = arith.constant 0 : index
    %22 = vector.load %arg3[%c0_8, %c0_9] : memref<1x128xf32, #tpu.memory_space<vmem>>, vector<1x128xf32>
    %23 = vector.broadcast %22 : vector<1x128xf32> to vector<16x128xf32>
    %24 = arith.addf %21, %23 : vector<16x128xf32>
    %c0_10 = arith.constant 0 : index
    %c0_11 = arith.constant 0 : index
    %25 = vector.load %arg4[%c0_10, %c0_11] : memref<16x128xf32, #tpu.memory_space<vmem>>, vector<16x128xf32>
    tpu.vector_store %arg4[%c0_10, %c0_11], %24 {strides = array<i32>} : memref<16x128xf32, #tpu.memory_space<vmem>>, vector<16x128xf32>,
    return
  }
  func.func @transform_0(%arg0: i32) -> (i32, i32) {
    %c0_i32 = arith.constant 0 : i32
    %c0_i32_0 = arith.constant 0 : i32
    return %arg0, %c0_i32 : i32, i32
  }
  func.func @transform_1(%arg0: i32) -> (i32, i32) {
    %c0_i32 = arith.constant 0 : i32
    %c0_i32_0 = arith.constant 0 : i32
    %c0_i32_1 = arith.constant 0 : i32
    return %c0_i32, %c0_i32_0 : i32, i32
  }
  func.func @transform_2(%arg0: i32) -> (i32, i32) {
    %c0_i32 = arith.constant 0 : i32
    %c0_i32_0 = arith.constant 0 : i32
    %c0_i32_1 = arith.constant 0 : i32
    return %c0_i32, %c0_i32_0 : i32, i32
  }
  func.func @transform_3(%arg0: i32) -> (i32, i32) {
    %c0_i32 = arith.constant 0 : i32
    %c0_i32_0 = arith.constant 0 : i32
    return %arg0, %c0_i32 : i32, i32
  }
}

</mosaic_0001>

<llo_original>
// kernel: tpu_custom_call.1
$region0: #{tpu_custom_call.1}
  #allocation0 [shape = 'u32[]', space=smem, size = 0x4, offset = 0x4, fixed_abs, tag = 'smem constant byte address 0x4 - core index']
  #allocation1 [shape = 'u32[72,128]{1,0:T(1,128)}', space=vmem, size = 0x9000, scoped, tag = 'internal scratch']
  %s0 = inlined_call_operand.hbm [shape: f32[16,128], index: 0, kind: input, shape index: {}]
  %s1 = inlined_call_operand.hbm [shape: f32[1,128], index: 1, kind: input, shape index: {}]
  %s2 = inlined_call_operand.vmem [shape: f32[1,128], index: 2, kind: input, shape index: {}]
  %s3 = inlined_call_operand.hbm [shape: f32[16,128], index: 3, kind: output, shape index: {}]
  %s4 = sld [smem:[#allocation0]]
  $region30: #{tpu_custom_call.1} parent=0
    _
  %s6 = ssub.s32 1, %s4
  %s7 = scalar_select 0, %s6, %s4
  $region1: #{tpu_custom_call.1} parent=0
    #allocation2 [shape = 'u8[8192]{0}', space=vmem, size = 0x2000, scoped, tag = 'input window, operand 0, single buffered']
    #allocation3 [shape = 's32[1]{0}', space=sflag, size = 0x4, scoped, tag = 'scoped memory for tpu_custom_call.1']
    #allocation4 [shape = 's32[1]{0}', space=sflag, size = 0x4, scoped, tag = 'scoped memory for tpu_custom_call.1']
    #allocation5 [shape = 'u8[512]{0}', space=vmem, size = 0x400, scoped, tag = 'input window, operand 1, single buffered']
    #allocation6 [shape = 's32[1]{0}', space=sflag, size = 0x4, scoped, tag = 'scoped memory for tpu_custom_call.1']
    #allocation7 [shape = 'u8[8192]{0}', space=vmem, size = 0x2000, scoped, tag = 'output window, operand 0, single buffered']
    %8 = vsyncpa [#allocation3], 0
    %9 = vsyncpa [#allocation6], 0
    %10 = vsyncpa [#allocation4], 0
    // Predicated region
    $region2: #{tpu_custom_call.1} parent=1 // pred_check
      _
    $region3: #{tpu_custom_call.1} parent=1 // pred_check_branch
      %12 = sbr.rel (0) target = $region5
    $region4: #{tpu_custom_call.1} parent=1 // pred_region
      %14 = vsyncadd [#allocation3], 0
      %s15 = sshll.u32 %s0, 4
      %s16 = int_to_ptr.hbm [resolvable:$true] %s15
      %s17 = sshll.u32 [#allocation2], 4
      %s18 = int_to_ptr.vmem [resolvable:$true] %s17
      %23 = dma.hbm_to_vmem [thread:$0]  %s16, 256, %s18, [#allocation3], 128, 128, 8
    $region5: #{tpu_custom_call.1} parent=1 // pred_fallthru
      _
    // Predicated region
    $region6: #{tpu_custom_call.1} parent=1 // pred_check
      _
    $region7: #{tpu_custom_call.1} parent=1 // pred_check_branch
      %25 = sbr.rel (0) target = $region9
    $region8: #{tpu_custom_call.1} parent=1 // pred_region
      %27 = vsyncadd [#allocation6], 0
      %s29 = sshll.u32 %s1, 4
      %s30 = int_to_ptr.hbm [resolvable:$true] %s29
      %s31 = sshll.u32 [#allocation5], 4
      %s32 = int_to_ptr.vmem [resolvable:$true] %s31
      %34 = dma.hbm_to_vmem [thread:$0]  %s30, 16, %s32, [#allocation6]
    $region9: #{tpu_custom_call.1} parent=1 // pred_fallthru
      _
    // Predicated region
    $region10: #{tpu_custom_call.1} parent=1 // pred_check
      _
    $region11: #{tpu_custom_call.1} parent=1 // pred_check_branch
      %36 = sbr.rel (0) target = $region13
    $region12: #{tpu_custom_call.1} parent=1 // pred_region
      _
    $region13: #{tpu_custom_call.1} parent=1 // pred_fallthru
      _
    // Predicated region
    $region14: #{tpu_custom_call.1} parent=1 // pred_check
      _
    $region15: #{tpu_custom_call.1} parent=1 // pred_check_branch
      %38 = sbr.rel (0) target = $region17
    $region16: #{tpu_custom_call.1} parent=1 // pred_region
      %40 = dma.done [#allocation3], 256
    $region17: #{tpu_custom_call.1} parent=1 // pred_fallthru
      _
    // Predicated region
    $region18: #{tpu_custom_call.1} parent=1 // pred_check
      _
    $region19: #{tpu_custom_call.1} parent=1 // pred_check_branch
      %42 = sbr.rel (0) target = $region21
    $region20: #{tpu_custom_call.1} parent=1 // pred_region
      %44 = dma.done [#allocation6], 16
    $region21: #{tpu_custom_call.1} parent=1 // pred_fallthru
      _
    %v45 = vld [vmem:[#allocation2] sm:$0xff]
    %v46 = vld [vmem:[#allocation2 + $0x8] sm:$0xff]
    %47 = vadd.xlane.f32.xlu0 %v45
    %v48 = vpop.xlane.xlu0 %47
    %49 = vadd.xlane.f32.xlu0 %v46
    %v50 = vpop.xlane.xlu0 %49
    %v51 = vrcp.pop 128.0
    %v52 = vmul.f32 128.0, %v51
    %v53 = vsub.f32 1.0, %v52
    %v54 = vmul.f32 %v51, %v53
    %v55 = vadd.f32 %v51, %v54
    %vm56 = vweird.f32 %v51
    %v57 = vsel %vm56, %v51, %v55
    %v58 = vmul.f32 %v48, %v57
    %v59 = vmul.f32 %v50, %v57
    %v60 = vsub.f32 %v45, %v58
    %v61 = vsub.f32 %v46, %v59
    %v62 = vmul.f32 %v60, %v60
    %v63 = vmul.f32 %v61, %v61
    %64 = vadd.xlane.f32.xlu0 %v62
    %v65 = vpop.xlane.xlu0 %64
    %66 = vadd.xlane.f32.xlu0 %v63
    %v67 = vpop.xlane.xlu0 %66
    %v68 = vrcp.pop 127.0
    %v69 = vmul.f32 127.0, %v68
    %v70 = vsub.f32 1.0, %v69
    %v71 = vmul.f32 %v68, %v70
    %v72 = vadd.f32 %v68, %v71
    %vm73 = vweird.f32 %v68
    %v74 = vsel %vm73, %v68, %v72
    %v75 = vmul.f32 %v65, %v74
    %v76 = vmul.f32 %v67, %v74
    %v77 = vrsqrt.pop %v75
    %v78 = vmul.f32 %v77, %v75
    %v79 = vmul.f32 %v78, %v77
    %v80 = vmul.f32 0.5, %v79
    %v81 = vsub.f32 1.5, %v80
    %v82 = vmul.f32 %v77, %v81
    %v83 = vmul.f32 %v75, %v82
    %vm84 = vcmp.eq.f32.partialorder %v75, inf
    %v85 = vsel %vm84, %v75, %v83
    %vm86 = vcmp.eq.f32.partialorder %v75, 0.0
    %v87 = vand.u32 %v75, 2147483648
    %v88 = vsel %vm86, %v87, %v85
    %v89 = vrsqrt.pop %v76
    %v90 = vmul.f32 %v89, %v76
    %v91 = vmul.f32 %v90, %v89
    %v92 = vmul.f32 0.5, %v91
    %v93 = vsub.f32 1.5, %v92
    %v94 = vmul.f32 %v89, %v93
    %v95 = vmul.f32 %v76, %v94
    %vm96 = vcmp.eq.f32.partialorder %v76, inf
    %v97 = vsel %vm96, %v76, %v95
    %vm98 = vcmp.eq.f32.partialorder %v76, 0.0
    %v99 = vand.u32 %v76, 2147483648
    %v100 = vsel %vm98, %v99, %v97
    %v101 = vadd.f32 %v88, 1e-06
    %v102 = vadd.f32 %v100, 1e-06
    %v103 = vrcp.pop %v101
    %v104 = vmul.f32 %v101, %v103
    %v105 = vsub.f32 1.0, %v104
    %v106 = vmul.f32 %v103, %v105
    %v107 = vadd.f32 %v103, %v106
    %vm108 = vweird.f32 %v101
    %vm109 = vweird.f32 %v103
    %vm110 = vmor %vm108, %vm109
    %v111 = vsel %vm110, %v103, %v107
    %v112 = vand.u32 2147483647, %v101
    %vm113 = vcmp.eq.f32.partialorder %v112, 8.507059e+37
    %v114 = vand.u32 %v101, 2147483648
    %v115 = vor.u32 1.1754944e-38, %v114
    %v116 = vsel %vm113, %v115, %v111
    %v117 = vmul.f32 1.0, %v116
    %v118 = vrcp.pop %v102
    %v119 = vmul.f32 %v102, %v118
    %v120 = vsub.f32 1.0, %v119
    %v121 = vmul.f32 %v118, %v120
    %v122 = vadd.f32 %v118, %v121
    %vm123 = vweird.f32 %v102
    %vm124 = vweird.f32 %v118
    %vm125 = vmor %vm123, %vm124
    %v126 = vsel %vm125, %v118, %v122
    %v127 = vand.u32 2147483647, %v102
    %vm128 = vcmp.eq.f32.partialorder %v127, 8.507059e+37
    %v129 = vand.u32 %v102, 2147483648
    %v130 = vor.u32 1.1754944e-38, %v129
    %v131 = vsel %vm128, %v130, %v126
    %v132 = vmul.f32 1.0, %v131
    %v133 = vld [vmem:[#allocation5] sm:$0x1]
    %v135 = vperm.slane %v133, 0
    %v137 = vmul.f32 %v135, %v60
    %v138 = vmul.f32 %v135, %v61
    %v139 = vmul.f32 %v137, %v117
    %v140 = vmul.f32 %v138, %v132
    %v141 = vld [vmem:[%s2] sm:$0x1]
    %v143 = vperm.slane %v141, 0
    %v145 = vadd.f32 %v139, %v143
    %v146 = vadd.f32 %v140, %v143
    %147 = vst [vmem:[#allocation7] sm:$0xff] %v145
    %148 = vst [vmem:[#allocation7 + $0x8] sm:$0xff] %v146
    // Predicated region
    $region22: #{tpu_custom_call.1} parent=1 // pred_check
      _
    $region23: #{tpu_custom_call.1} parent=1 // pred_check_branch
      %150 = sbr.rel (0) target = $region25
    $region24: #{tpu_custom_call.1} parent=1 // pred_region
      %152 = vsyncadd [#allocation4], 0
      %s153 = sshll.u32 [#allocation7], 4
      %s154 = int_to_ptr.vmem [resolvable:$true] %s153
      %s155 = sshll.u32 %s3, 4
      %s156 = int_to_ptr.hbm [resolvable:$true] %s155
      %161 = dma.vmem_to_hbm [thread:$0]  %s154, 256, %s156, [#allocation4], 128, 128, 8
    $region25: #{tpu_custom_call.1} parent=1 // pred_fallthru
      _
    // Predicated region
    $region26: #{tpu_custom_call.1} parent=1 // pred_check
      _
    $region27: #{tpu_custom_call.1} parent=1 // pred_check_branch
      %163 = sbr.rel (0) target = $region29
    $region28: #{tpu_custom_call.1} parent=1 // pred_region
      %165 = dma.done [#allocation4], 256
    $region29: #{tpu_custom_call.1} parent=1 // pred_fallthru
      _
    %166 = vsyncpa [#allocation3], 1
    %167 = vsyncpa [#allocation6], 1
    %168 = vsyncpa [#allocation4], 1

</llo_original>
